<compile_context>
chip_gen: v7x
topology: tpu7x:2x2x1
jax: 0.10.0
libtpu: 0.0.40
codegen_flags: <defaults>
</compile_context>

<pallas_src>
import functools

import jax
import jax.numpy as jnp
from jax.experimental import pallas as pl
from jax.experimental.pallas import tpu as pltpu

NEG_SLOPE = 0.01   # nn.LeakyReLU() default
SCALE = 100.0      # DeepLeakyReluSigmoidScaled.scale


def _leaky_relu(x):
    return jnp.where(x > 0, x, NEG_SLOPE * x)


def _round_up(n, m):
    return ((n + m - 1) // m) * m


def _mlp_kernel(x_ref, w1_ref, b1_ref, w2_ref, b2_ref, w3_ref, b3_ref, o_ref):
    # Three matmuls + biases + LeakyReLU + sigmoid*scale fused in VMEM for this batch
    # tile. MXU operands are bf16 with f32 accumulation; all elementwise math stays f32
    # (v5e VPU has no bf16 VALU).
    x = x_ref[...].astype(jnp.bfloat16)                                   # (bm, D_in)

    h1 = jnp.dot(x, w1_ref[...], preferred_element_type=jnp.float32) + b1_ref[...]
    h1 = _leaky_relu(h1)

    h2 = jnp.dot(h1.astype(jnp.bfloat16), w2_ref[...],
                 preferred_element_type=jnp.float32) + b2_ref[...]
    h2 = _leaky_relu(h2)

    h3 = jnp.dot(h2.astype(jnp.bfloat16), w3_ref[...],
                 preferred_element_type=jnp.float32) + b3_ref[...]

    # Epilogue: 100 * sigmoid(h3). exp and the approximate reciprocal both go to the
    # EUP slot -> essentially free filler work.
    o_ref[...] = (SCALE * pl.reciprocal(1.0 + jnp.exp(-h3), approx=True)).astype(o_ref.dtype)


def prepare_params(w1, b1, w2, b2, w3, b3):
    """One-time (init-time) prep: weights become bf16 MXU operands, biases stay f32.

    Hoisted out of the per-call jitted wrapper so no pad/cast kernels run per forward.
    """
    bf = lambda a: a.astype(jnp.bfloat16)
    f32 = lambda a: a.astype(jnp.float32)
    return bf(w1), f32(b1), bf(w2), f32(b2), bf(w3), f32(b3)


@functools.partial(jax.jit, static_argnames=("block_m",))
def deep_leaky_relu_sigmoid_scaled(x, w1, b1, w2, b2, w3, b3, *, block_m=2048):
    """x: (B, D_in) f32; w_i: (in, out) bf16; b_i: (1, out) f32. Returns (B, D_out) f32."""
    B, D_in = x.shape
    H = w1.shape[1]            # = 2 * D_in
    D_out = w3.shape[1]

    # Batch tile: as large as block_m allows, but keep at least 2 grid steps for large B
    # (the "parallel" axis is what shards work across v7x's 2 TensorCores; the extra
    # ~0.35us step on single-TC v5e/v6e is negligible). Round to the 8-row sublane.
    bm = min(block_m, max(8, _round_up(pl.cdiv(B, 2), 8)))
    grid = (pl.cdiv(B, bm),)

    # Constant index_map -> weights/biases stay resident in VMEM across the grid.
    resident = lambda shape: pl.BlockSpec(shape, lambda i: (0, 0))

    return pl.pallas_call(
        _mlp_kernel,
        out_shape=jax.ShapeDtypeStruct((B, D_out), jnp.float32),
        grid_spec=pltpu.PrefetchScalarGridSpec(
            num_scalar_prefetch=0,
            grid=grid,
            in_specs=[
                pl.BlockSpec((bm, D_in), lambda i: (i, 0)),   # x tile (streamed, unpadded)
                resident((D_in, H)),       # w1
                resident((1, H)),          # b1
                resident((H, D_in)),       # w2
                resident((1, D_in)),       # b2
                resident((D_in, D_out)),   # w3
                resident((1, D_out)),      # b3
            ],
            out_specs=pl.BlockSpec((bm, D_out), lambda i: (i, 0)),   # unpadded output
        ),
        compiler_params=pltpu.CompilerParams(
            dimension_semantics=("parallel",),
            vmem_limit_bytes=32 * 1024 * 1024,   # safe headroom on v7x's 64 MiB VMEM
        ),
    )(x, w1, b1, w2, b2, w3, b3)


def init_params(key, input_neurons, output_neurons):
    """Deterministic PyTorch-style init: U(-1/sqrt(fan_in), 1/sqrt(fan_in))."""
    def linear(key, fan_in, fan_out):
        kw, kb = jax.random.split(key)
        bound = 1.0 / jnp.sqrt(fan_in)
        # stored transposed: (fan_in, fan_out)
        w = jax.random.uniform(kw, (fan_in, fan_out), jnp.float32, -bound, bound)
        b = jax.random.uniform(kb, (1, fan_out), jnp.float32, -bound, bound)
        return w, b

    k1, k2, k3 = jax.random.split(key, 3)
    w1, b1 = linear(k1, input_neurons, input_neurons * 2)
    w2, b2 = linear(k2, input_neurons * 2, input_neurons)
    w3, b3 = linear(k3, input_neurons, output_neurons)
    return w1, b1, w2, b2, w3, b3


def reference(x, w1, b1, w2, b2, w3, b3):
    # Mirrors the kernel's numerics: bf16 dot operands, f32 accumulation, exact sigmoid.
    bf = lambda a: a.astype(jnp.bfloat16)
    h = _leaky_relu(jnp.dot(bf(x), bf(w1), preferred_element_type=jnp.float32) + b1)
    h = _leaky_relu(jnp.dot(bf(h), bf(w2), preferred_element_type=jnp.float32) + b2)
    h = jnp.dot(bf(h), bf(w3), preferred_element_type=jnp.float32) + b3
    return SCALE * jax.nn.sigmoid(h)


if __name__ == "__main__":
    INPUT_NEURONS = 32
    OUTPUT_NEURONS = 16
    BATCH = 8

    key = jax.random.PRNGKey(0)
    kx, kp = jax.random.split(key)
    params_f32 = init_params(kp, INPUT_NEURONS, OUTPUT_NEURONS)
    params = prepare_params(*params_f32)   # hoisted, done once

    # Test 1: small batch (tile clamps to the batch).
    x = jax.random.normal(kx, (BATCH, INPUT_NEURONS), jnp.float32)
    out = jax.block_until_ready(deep_leaky_relu_sigmoid_scaled(x, *params))
    ref = reference(x, *params_f32)
    assert out.shape == (BATCH, OUTPUT_NEURONS)
    assert jnp.allclose(out, ref, atol=5e-2, rtol=5e-3), "mismatch vs JAX reference (test 1)"

    # Test 2: batch not a multiple of block_m (exercises the masked partial last tile).
    x2 = jax.random.normal(jax.random.PRNGKey(1), (20, INPUT_NEURONS), jnp.float32)
    out2 = jax.block_until_ready(deep_leaky_relu_sigmoid_scaled(x2, *params, block_m=8))
    ref2 = reference(x2, *params_f32)
    assert out2.shape == (20, OUTPUT_NEURONS)
    assert jnp.allclose(out2, ref2, atol=5e-2, rtol=5e-3), "mismatch vs JAX reference (test 2)"

    print("KERNEL_OK")
</pallas_src>

<mosaic_0001>
module attributes {stable_mosaic.version = 11 : i64} {
  func.func @_mlp_kernel(%arg0: i32, %arg1: memref<8x32xf32, #tpu.memory_space<vmem>>, %arg2: memref<32x64xbf16, #tpu.memory_space<vmem>>, %arg3: memref<1x64xf32, #tpu.memory_space<vmem>>, %arg4: memref<64x32xbf16, #tpu.memory_space<vmem>>, %arg5: memref<1x32xf32, #tpu.memory_space<vmem>>, %arg6: memref<32x16xbf16, #tpu.memory_space<vmem>>, %arg7: memref<1x16xf32, #tpu.memory_space<vmem>>, %arg8: memref<8x16xf32, #tpu.memory_space<vmem>>) attributes {dimension_semantics = [#tpu.dimension_semantics<parallel>], iteration_bounds = array<i64: 1>, scalar_prefetch = 0 : i64, scratch_operands = 0 : i64, tpu.core_type = #tpu.core_type<tc>, window_params = [{transform_indices = @transform_0, window_bounds = array<i64: 8, 32>}, {pipeline_mode = #tpu.pipeline_mode<synchronous>, transform_indices = @transform_1, window_bounds = array<i64: 32, 64>}, {pipeline_mode = #tpu.pipeline_mode<synchronous>, transform_indices = @transform_2, window_bounds = array<i64: 1, 64>}, {pipeline_mode = #tpu.pipeline_mode<synchronous>, transform_indices = @transform_3, window_bounds = array<i64: 64, 32>}, {pipeline_mode = #tpu.pipeline_mode<synchronous>, transform_indices = @transform_4, window_bounds = array<i64: 1, 32>}, {pipeline_mode = #tpu.pipeline_mode<synchronous>, transform_indices = @transform_5, window_bounds = array<i64: 32, 16>}, {pipeline_mode = #tpu.pipeline_mode<synchronous>, transform_indices = @transform_6, window_bounds = array<i64: 1, 16>}, {transform_indices = @transform_7, window_bounds = array<i64: 8, 16>}]} {
    %c0 = arith.constant 0 : index
    %c0_0 = arith.constant 0 : index
    %0 = vector.load %arg1[%c0, %c0_0] : memref<8x32xf32, #tpu.memory_space<vmem>>, vector<8x32xf32>
    %1 = arith.truncf %0 : vector<8x32xf32> to vector<8x32xbf16>
    %c0_1 = arith.constant 0 : index
    %c0_2 = arith.constant 0 : index
    %2 = vector.load %arg2[%c0_1, %c0_2] : memref<32x64xbf16, #tpu.memory_space<vmem>>, vector<32x64xbf16>
    %cst = arith.constant dense<0.000000e+00> : vector<8x64xf32>
    %3 = tpu.matmul %1, %2, %cst {dimension_numbers = #tpu.dot_dimension_numbers<[1], [0], [0], [1], [0, 0, 1, 1], [], []>} : vector<8x32xbf16>, vector<32x64xbf16>, vector<8x64xf32> -> vector<8x64xf32>
    %c0_3 = arith.constant 0 : index
    %c0_4 = arith.constant 0 : index
    %4 = vector.load %arg3[%c0_3, %c0_4] : memref<1x64xf32, #tpu.memory_space<vmem>>, vector<1x64xf32>
    %5 = vector.broadcast %4 : vector<1x64xf32> to vector<8x64xf32>
    %6 = arith.addf %3, %5 : vector<8x64xf32>
    %cst_5 = arith.constant 0.000000e+00 : f32
    %7 = vector.broadcast %cst_5 : f32 to vector<8x64xf32>
    %8 = arith.cmpf ogt, %6, %7 : vector<8x64xf32>
    %cst_6 = arith.constant 0.00999999977 : f32
    %9 = vector.broadcast %cst_6 : f32 to vector<8x64xf32>
    %10 = arith.mulf %9, %6 : vector<8x64xf32>
    %11 = arith.select %8, %6, %10 : vector<8x64xi1>, vector<8x64xf32>
    %12 = arith.truncf %11 : vector<8x64xf32> to vector<8x64xbf16>
    %c0_7 = arith.constant 0 : index
    %c0_8 = arith.constant 0 : index
    %13 = vector.load %arg4[%c0_7, %c0_8] : memref<64x32xbf16, #tpu.memory_space<vmem>>, vector<64x32xbf16>
    %cst_9 = arith.constant dense<0.000000e+00> : vector<8x32xf32>
    %14 = tpu.matmul %12, %13, %cst_9 {dimension_numbers = #tpu.dot_dimension_numbers<[1], [0], [0], [1], [0, 0, 1, 1], [], []>} : vector<8x64xbf16>, vector<64x32xbf16>, vector<8x32xf32> -> vector<8x32xf32>
    %c0_10 = arith.constant 0 : index
    %c0_11 = arith.constant 0 : index
    %15 = vector.load %arg5[%c0_10, %c0_11] : memref<1x32xf32, #tpu.memory_space<vmem>>, vector<1x32xf32>
    %16 = vector.broadcast %15 : vector<1x32xf32> to vector<8x32xf32>
    %17 = arith.addf %14, %16 : vector<8x32xf32>
    %cst_12 = arith.constant 0.000000e+00 : f32
    %18 = vector.broadcast %cst_12 : f32 to vector<8x32xf32>
    %19 = arith.cmpf ogt, %17, %18 : vector<8x32xf32>
    %cst_13 = arith.constant 0.00999999977 : f32
    %20 = vector.broadcast %cst_13 : f32 to vector<8x32xf32>
    %21 = arith.mulf %20, %17 : vector<8x32xf32>
    %22 = arith.select %19, %17, %21 : vector<8x32xi1>, vector<8x32xf32>
    %23 = arith.truncf %22 : vector<8x32xf32> to vector<8x32xbf16>
    %c0_14 = arith.constant 0 : index
    %c0_15 = arith.constant 0 : index
    %24 = vector.load %arg6[%c0_14, %c0_15] : memref<32x16xbf16, #tpu.memory_space<vmem>>, vector<32x16xbf16>
    %cst_16 = arith.constant dense<0.000000e+00> : vector<8x16xf32>
    %25 = tpu.matmul %23, %24, %cst_16 {dimension_numbers = #tpu.dot_dimension_numbers<[1], [0], [0], [1], [0, 0, 1, 1], [], []>} : vector<8x32xbf16>, vector<32x16xbf16>, vector<8x16xf32> -> vector<8x16xf32>
    %c0_17 = arith.constant 0 : index
    %c0_18 = arith.constant 0 : index
    %26 = vector.load %arg7[%c0_17, %c0_18] : memref<1x16xf32, #tpu.memory_space<vmem>>, vector<1x16xf32>
    %27 = vector.broadcast %26 : vector<1x16xf32> to vector<8x16xf32>
    %28 = arith.addf %25, %27 : vector<8x16xf32>
    %cst_19 = arith.constant 0.000000e+00 : f32
    %29 = vector.broadcast %cst_19 : f32 to vector<8x16xf32>
    %30 = arith.subf %29, %28 : vector<8x16xf32>
    %31 = math.exp %30 : vector<8x16xf32>
    %cst_20 = arith.constant 1.000000e+00 : f32
    %32 = vector.broadcast %cst_20 : f32 to vector<8x16xf32>
    %33 = arith.addf %32, %31 : vector<8x16xf32>
    %34 = tpu.reciprocal %33 {approx = true} : vector<8x16xf32> -> vector<8x16xf32>
    %cst_21 = arith.constant 1.000000e+02 : f32
    %35 = vector.broadcast %cst_21 : f32 to vector<8x16xf32>
    %36 = arith.mulf %35, %34 : vector<8x16xf32>
    %c0_22 = arith.constant 0 : index
    %c0_23 = arith.constant 0 : index
    %37 = vector.load %arg8[%c0_22, %c0_23] : memref<8x16xf32, #tpu.memory_space<vmem>>, vector<8x16xf32>
    tpu.vector_store %arg8[%c0_22, %c0_23], %36 {strides = array<i32>} : memref<8x16xf32, #tpu.memory_space<vmem>>, vector<8x16xf32>,
    return
  }
  func.func @transform_0(%arg0: i32) -> (i32, i32) {
    %c0_i32 = arith.constant 0 : i32
    %c0_i32_0 = arith.constant 0 : i32
    return %arg0, %c0_i32 : i32, i32
  }
  func.func @transform_1(%arg0: i32) -> (i32, i32) {
    %c0_i32 = arith.constant 0 : i32
    %c0_i32_0 = arith.constant 0 : i32
    %c0_i32_1 = arith.constant 0 : i32
    return %c0_i32, %c0_i32_0 : i32, i32
  }
  func.func @transform_2(%arg0: i32) -> (i32, i32) {
    %c0_i32 = arith.constant 0 : i32
    %c0_i32_0 = arith.constant 0 : i32
    %c0_i32_1 = arith.constant 0 : i32
    return %c0_i32, %c0_i32_0 : i32, i32
  }
  func.func @transform_3(%arg0: i32) -> (i32, i32) {
    %c0_i32 = arith.constant 0 : i32
    %c0_i32_0 = arith.constant 0 : i32
    %c0_i32_1 = arith.constant 0 : i32
    return %c0_i32, %c0_i32_0 : i32, i32
  }
  func.func @transform_4(%arg0: i32) -> (i32, i32) {
    %c0_i32 = arith.constant 0 : i32
    %c0_i32_0 = arith.constant 0 : i32
    %c0_i32_1 = arith.constant 0 : i32
    return %c0_i32, %c0_i32_0 : i32, i32
  }
  func.func @transform_5(%arg0: i32) -> (i32, i32) {
    %c0_i32 = arith.constant 0 : i32
    %c0_i32_0 = arith.constant 0 : i32
    %c0_i32_1 = arith.constant 0 : i32
    return %c0_i32, %c0_i32_0 : i32, i32
  }
  func.func @transform_6(%arg0: i32) -> (i32, i32) {
    %c0_i32 = arith.constant 0 : i32
    %c0_i32_0 = arith.constant 0 : i32
    %c0_i32_1 = arith.constant 0 : i32
    return %c0_i32, %c0_i32_0 : i32, i32
  }
  func.func @transform_7(%arg0: i32) -> (i32, i32) {
    %c0_i32 = arith.constant 0 : i32
    %c0_i32_0 = arith.constant 0 : i32
    return %arg0, %c0_i32 : i32, i32
  }
}

</mosaic_0001>

<llo_original>
// kernel: deep_leaky_relu_sigmoid_scaled.1
$region0: #{deep_leaky_relu_sigmoid_scaled.1}
  #allocation0 [shape = 'u32[]', space=smem, size = 0x4, offset = 0x4, fixed_abs, tag = 'smem constant byte address 0x4 - core index']
  #allocation1 [shape = 'u32[144,128]{1,0:T(1,128)}', space=vmem, size = 0x12000, scoped, tag = 'internal scratch']
  %s0 = inlined_call_operand.vmem [shape: f32[8,32], index: 0, kind: input, shape index: {}]
  %s1 = inlined_call_operand.vmem [shape: bf16[32,64], index: 1, kind: input, shape index: {}]
  %s2 = inlined_call_operand.vmem [shape: f32[1,64], index: 2, kind: input, shape index: {}]
  %s3 = inlined_call_operand.vmem [shape: bf16[64,32], index: 3, kind: input, shape index: {}]
  %s4 = inlined_call_operand.vmem [shape: f32[1,32], index: 4, kind: input, shape index: {}]
  %s5 = inlined_call_operand.vmem [shape: bf16[32,16], index: 5, kind: input, shape index: {}]
  %s6 = inlined_call_operand.vmem [shape: f32[1,16], index: 6, kind: input, shape index: {}]
  %s7 = inlined_call_operand.hbm [shape: f32[8,16], index: 7, kind: output, shape index: {}]
  %s8 = sld [smem:[#allocation0]]
  $region38: #{deep_leaky_relu_sigmoid_scaled.1} parent=0
    _
  %s10 = ssub.s32 1, %s8
  %s11 = scalar_select 0, %s10, %s8
  $region1: #{deep_leaky_relu_sigmoid_scaled.1} parent=0
    #allocation2 [shape = 'u8[4096]{0}', space=vmem, size = 0x1000, scoped, tag = 'output window, operand 0, single buffered']
    #allocation3 [shape = 's32[1]{0}', space=sflag, size = 0x4, scoped, tag = 'scoped memory for deep_leaky_relu_sigmoid_scaled.1']
    %12 = vsyncpa [#allocation3], 0
    // Predicated region
    $region2: #{deep_leaky_relu_sigmoid_scaled.1} parent=1 // pred_check
      _
    $region3: #{deep_leaky_relu_sigmoid_scaled.1} parent=1 // pred_check_branch
      %14 = sbr.rel (0) target = $region5
    $region4: #{deep_leaky_relu_sigmoid_scaled.1} parent=1 // pred_region
      _
    $region5: #{deep_leaky_relu_sigmoid_scaled.1} parent=1 // pred_fallthru
      _
    // Predicated region
    $region6: #{deep_leaky_relu_sigmoid_scaled.1} parent=1 // pred_check
      _
    $region7: #{deep_leaky_relu_sigmoid_scaled.1} parent=1 // pred_check_branch
      %16 = sbr.rel (0) target = $region9
    $region8: #{deep_leaky_relu_sigmoid_scaled.1} parent=1 // pred_region
      _
    $region9: #{deep_leaky_relu_sigmoid_scaled.1} parent=1 // pred_fallthru
      _
    // Predicated region
    $region10: #{deep_leaky_relu_sigmoid_scaled.1} parent=1 // pred_check
      _
    $region11: #{deep_leaky_relu_sigmoid_scaled.1} parent=1 // pred_check_branch
      %18 = sbr.rel (0) target = $region13
    $region12: #{deep_leaky_relu_sigmoid_scaled.1} parent=1 // pred_region
      _
    $region13: #{deep_leaky_relu_sigmoid_scaled.1} parent=1 // pred_fallthru
      _
    // Predicated region
    $region14: #{deep_leaky_relu_sigmoid_scaled.1} parent=1 // pred_check
      _
    $region15: #{deep_leaky_relu_sigmoid_scaled.1} parent=1 // pred_check_branch
      %20 = sbr.rel (0) target = $region17
    $region16: #{deep_leaky_relu_sigmoid_scaled.1} parent=1 // pred_region
      _
    $region17: #{deep_leaky_relu_sigmoid_scaled.1} parent=1 // pred_fallthru
      _
    // Predicated region
    $region18: #{deep_leaky_relu_sigmoid_scaled.1} parent=1 // pred_check
      _
    $region19: #{deep_leaky_relu_sigmoid_scaled.1} parent=1 // pred_check_branch
      %22 = sbr.rel (0) target = $region21
    $region20: #{deep_leaky_relu_sigmoid_scaled.1} parent=1 // pred_region
      _
    $region21: #{deep_leaky_relu_sigmoid_scaled.1} parent=1 // pred_fallthru
      _
    // Predicated region
    $region22: #{deep_leaky_relu_sigmoid_scaled.1} parent=1 // pred_check
      _
    $region23: #{deep_leaky_relu_sigmoid_scaled.1} parent=1 // pred_check_branch
      %24 = sbr.rel (0) target = $region25
    $region24: #{deep_leaky_relu_sigmoid_scaled.1} parent=1 // pred_region
      _
    $region25: #{deep_leaky_relu_sigmoid_scaled.1} parent=1 // pred_fallthru
      _
    // Predicated region
    $region26: #{deep_leaky_relu_sigmoid_scaled.1} parent=1 // pred_check
      _
    $region27: #{deep_leaky_relu_sigmoid_scaled.1} parent=1 // pred_check_branch
      %26 = sbr.rel (0) target = $region29
    $region28: #{deep_leaky_relu_sigmoid_scaled.1} parent=1 // pred_region
      _
    $region29: #{deep_leaky_relu_sigmoid_scaled.1} parent=1 // pred_fallthru
      _
    %v28 = vld [vmem:[%s0] sm:$0xff]
    %v29 = vpack.c.bf16 %v28, %v28
    %v30 = vld [vmem:[%s1] sm:$0xf]
    %v31 = vld [vmem:[%s1 + $0x4] sm:$0xf]
    %v32 = vld [vmem:[%s1 + $0x8] sm:$0xf]
    %v33 = vld [vmem:[%s1 + $0xc] sm:$0xf]
    %v34 = vld [vmem:[%s2] sm:$0x1]
    %v36 = vlaneseq
    %v37 = vshrl.u32 %v36, 7
    %v38 = vsub.s32 0, %v37
    %v39 = vrot.slane %v34, %v38
    %v45 = vunpack.c.l.b16 %v30
    %v46 = vunpack.c.l.b16 %v31
    %v47 = vunpack.c.l.b16 %v32
    %v48 = vunpack.c.l.b16 %v33
    %v49 = vpack.c.b16 %v46, %v45
    %v50 = vpack.c.b16 %v48, %v47
    %vm53 = vcmask 261120
    %v55 = vsel %vm53, %v29, 0
    %57 = vmatprep.subr.bf16.mxu0 0
    %58 = vmatpush1.bf16.msra.mxu0 %v49
    %59 = vmatprep.subr.bf16.mxu0 0
    %60 = vmatpush1.bf16.msra.mxu0 %v50
    %61 = vmatprep.subr.bf16.mxu0 0
    %62 = vmatpush1.bf16.msra.mxu0 0
    %63 = vmatprep.subr.bf16.mxu0 0
    %64 = vmatpush1.bf16.msra.mxu0 0
    %65 = vmatprep.subr.bf16.mxu0 0
    %66 = vmatpush1.bf16.msra.mxu0 0
    %67 = vmatprep.subr.bf16.mxu0 0
    %68 = vmatpush1.bf16.msra.mxu0 0
    %69 = vmatprep.subr.bf16.mxu0 0
    %70 = vmatpush1.bf16.msra.mxu0 0
    %71 = vmatprep.subr.bf16.mxu0 0
    %72 = vmatpush1.bf16.msra.mxu0 0
    %73 = vmatprep.subr.bf16.mxu0 0
    %74 = vmatpush1.bf16.msra.mxu0 0
    %75 = vmatprep.subr.bf16.mxu0 0
    %76 = vmatpush1.bf16.msra.mxu0 0
    %77 = vmatprep.subr.bf16.mxu0 0
    %78 = vmatpush1.bf16.msra.mxu0 0
    %79 = vmatprep.subr.bf16.mxu0 0
    %80 = vmatpush1.bf16.msra.mxu0 0
    %81 = vmatprep.subr.bf16.mxu0 0
    %82 = vmatpush1.bf16.msra.mxu0 0
    %83 = vmatprep.subr.bf16.mxu0 0
    %84 = vmatpush1.bf16.msra.mxu0 0
    %85 = vmatprep.subr.bf16.mxu0 0
    %86 = vmatpush1.bf16.msra.mxu0 0
    %87 = vmatprep.subr.bf16.mxu0 0
    %88 = vmatpush1.bf16.msra.mxu0 0
    %89 = vmatprep.mubr.bf16.mxu0 0
    %90 = vmatmul.mubr.bf16.gmra.mrb[0].mxu0 %v55
    %v91 = vpop.f32.mrb[0].mxu0
    %v92 = vadd.f32 %v39, %v91
    %v93 = vpop.f32.mrb[0].mxu0
    %v94 = vpop.f32.mrb[0].mxu0
    %v95 = vpop.f32.mrb[0].mxu0
    %96 = vdwg.mxu0
    %vm97 = vcmp.gt.f32.partialorder %v92, 0.0
    %v98 = vmul.f32 %v92, 0.01
    %v99 = vsel %vm97, %v92, %v98
    %v100 = vpack.c.bf16 %v99, %v99
    %v101 = vld [vmem:[%s3] sm:$0xf]
    %v102 = vld [vmem:[%s3 + $0x4] sm:$0xf]
    %v103 = vld [vmem:[%s3 + $0x8] sm:$0xf]
    %v104 = vld [vmem:[%s3 + $0xc] sm:$0xf]
    %v105 = vld [vmem:[%s3 + $0x10] sm:$0xf]
    %v106 = vld [vmem:[%s3 + $0x14] sm:$0xf]
    %v107 = vld [vmem:[%s3 + $0x18] sm:$0xf]
    %v108 = vld [vmem:[%s3 + $0x1c] sm:$0xf]
    %v109 = vld [vmem:[%s4] sm:$0x1]
    %v111 = vlaneseq
    %v112 = vshrl.u32 %v111, 7
    %v113 = vsub.s32 0, %v112
    %v114 = vrot.slane %v109, %v113
    %v124 = vunpack.c.l.b16 %v101
    %v125 = vunpack.c.l.b16 %v102
    %v126 = vunpack.c.l.b16 %v103
    %v127 = vunpack.c.l.b16 %v104
    %v128 = vunpack.c.l.b16 %v105
    %v129 = vunpack.c.l.b16 %v106
    %v130 = vunpack.c.l.b16 %v107
    %v131 = vunpack.c.l.b16 %v108
    %v132 = vpack.c.b16 %v125, %v124
    %v133 = vpack.c.b16 %v127, %v126
    %v134 = vpack.c.b16 %v129, %v128
    %v135 = vpack.c.b16 %v131, %v130
    %vm140 = vcmask 523264
    %v142 = vsel %vm140, %v100, 0
    %144 = vmatprep.subr.bf16.mxu0 0
    %145 = vmatpush1.bf16.msra.mxu0 %v132
    %146 = vmatprep.subr.bf16.mxu0 0
    %147 = vmatpush1.bf16.msra.mxu0 %v133
    %148 = vmatprep.subr.bf16.mxu0 0
    %149 = vmatpush1.bf16.msra.mxu0 %v134
    %150 = vmatprep.subr.bf16.mxu0 0
    %151 = vmatpush1.bf16.msra.mxu0 %v135
    %152 = vmatprep.subr.bf16.mxu0 0
    %153 = vmatpush1.bf16.msra.mxu0 0
    %154 = vmatprep.subr.bf16.mxu0 0
    %155 = vmatpush1.bf16.msra.mxu0 0
    %156 = vmatprep.subr.bf16.mxu0 0
    %157 = vmatpush1.bf16.msra.mxu0 0
    %158 = vmatprep.subr.bf16.mxu0 0
    %159 = vmatpush1.bf16.msra.mxu0 0
    %160 = vmatprep.subr.bf16.mxu0 0
    %161 = vmatpush1.bf16.msra.mxu0 0
    %162 = vmatprep.subr.bf16.mxu0 0
    %163 = vmatpush1.bf16.msra.mxu0 0
    %164 = vmatprep.subr.bf16.mxu0 0
    %165 = vmatpush1.bf16.msra.mxu0 0
    %166 = vmatprep.subr.bf16.mxu0 0
    %167 = vmatpush1.bf16.msra.mxu0 0
    %168 = vmatprep.subr.bf16.mxu0 0
    %169 = vmatpush1.bf16.msra.mxu0 0
    %170 = vmatprep.subr.bf16.mxu0 0
    %171 = vmatpush1.bf16.msra.mxu0 0
    %172 = vmatprep.subr.bf16.mxu0 0
    %173 = vmatpush1.bf16.msra.mxu0 0
    %174 = vmatprep.subr.bf16.mxu0 0
    %175 = vmatpush1.bf16.msra.mxu0 0
    %176 = vmatprep.mubr.bf16.mxu0 0
    %177 = vmatmul.mubr.bf16.gmra.mrb[0].mxu0 %v142
    %v178 = vpop.f32.mrb[0].mxu0
    %v179 = vadd.f32 %v114, %v178
    %v180 = vpop.f32.mrb[0].mxu0
    %v181 = vpop.f32.mrb[0].mxu0
    %v182 = vpop.f32.mrb[0].mxu0
    %183 = vdwg.mxu0
    %vm184 = vcmp.gt.f32.partialorder %v179, 0.0
    %v185 = vmul.f32 %v179, 0.01
    %v186 = vsel %vm184, %v179, %v185
    %v187 = vpack.c.bf16 %v186, %v186
    %v188 = vld [vmem:[%s5] sm:$0xf]
    %v189 = vld [vmem:[%s5 + $0x4] sm:$0xf]
    %v190 = vld [vmem:[%s5 + $0x8] sm:$0xf]
    %v191 = vld [vmem:[%s5 + $0xc] sm:$0xf]
    %v192 = vld [vmem:[%s6] sm:$0x1]
    %v194 = vlaneseq
    %v195 = vshrl.u32 %v194, 7
    %v196 = vsub.s32 0, %v195
    %v197 = vrot.slane %v192, %v196
    %v203 = vunpack.c.l.b16 %v188
    %v204 = vunpack.c.l.b16 %v189
    %v205 = vunpack.c.l.b16 %v190
    %v206 = vunpack.c.l.b16 %v191
    %v207 = vpack.c.b16 %v204, %v203
    %v208 = vpack.c.b16 %v206, %v205
    %v212 = vsel %vm53, %v187, 0
    %214 = vmatprep.subr.bf16.mxu0 0
    %215 = vmatpush1.bf16.msra.mxu0 %v207
    %216 = vmatprep.subr.bf16.mxu0 0
    %217 = vmatpush1.bf16.msra.mxu0 %v208
    %218 = vmatprep.subr.bf16.mxu0 0
    %219 = vmatpush1.bf16.msra.mxu0 0
    %220 = vmatprep.subr.bf16.mxu0 0
    %221 = vmatpush1.bf16.msra.mxu0 0
    %222 = vmatprep.subr.bf16.mxu0 0
    %223 = vmatpush1.bf16.msra.mxu0 0
    %224 = vmatprep.subr.bf16.mxu0 0
    %225 = vmatpush1.bf16.msra.mxu0 0
    %226 = vmatprep.subr.bf16.mxu0 0
    %227 = vmatpush1.bf16.msra.mxu0 0
    %228 = vmatprep.subr.bf16.mxu0 0
    %229 = vmatpush1.bf16.msra.mxu0 0
    %230 = vmatprep.subr.bf16.mxu0 0
    %231 = vmatpush1.bf16.msra.mxu0 0
    %232 = vmatprep.subr.bf16.mxu0 0
    %233 = vmatpush1.bf16.msra.mxu0 0
    %234 = vmatprep.subr.bf16.mxu0 0
    %235 = vmatpush1.bf16.msra.mxu0 0
    %236 = vmatprep.subr.bf16.mxu0 0
    %237 = vmatpush1.bf16.msra.mxu0 0
    %238 = vmatprep.subr.bf16.mxu0 0
    %239 = vmatpush1.bf16.msra.mxu0 0
    %240 = vmatprep.subr.bf16.mxu0 0
    %241 = vmatpush1.bf16.msra.mxu0 0
    %242 = vmatprep.subr.bf16.mxu0 0
    %243 = vmatpush1.bf16.msra.mxu0 0
    %244 = vmatprep.subr.bf16.mxu0 0
    %245 = vmatpush1.bf16.msra.mxu0 0
    %246 = vmatprep.mubr.bf16.mxu0 0
    %247 = vmatmul.mubr.bf16.gmra.mrb[0].mxu0 %v212
    %v248 = vpop.f32.mrb[0].mxu0
    %v249 = vadd.f32 %v197, %v248
    %v250 = vpop.f32.mrb[0].mxu0
    %v251 = vpop.f32.mrb[0].mxu0
    %v252 = vpop.f32.mrb[0].mxu0
    %253 = vdwg.mxu0
    %v254 = vsub.f32 0.0, %v249
    %v255 = vmul.f32 %v254, 1.442695
    %v256 = vpow.pop %v255
    %v257 = vadd.f32 %v256, 1.0
    %v258 = vrcp.pop %v257
    %v259 = vmul.f32 %v258, 100.0
    %vm260 = vcmask 130048
    %261 = vst.msk [vmem:[#allocation2] sm:$0xff] %vm260, %v259
    // Predicated region
    $region30: #{deep_leaky_relu_sigmoid_scaled.1} parent=1 // pred_check
      _
    $region31: #{deep_leaky_relu_sigmoid_scaled.1} parent=1 // pred_check_branch
      %263 = sbr.rel (0) target = $region33
    $region32: #{deep_leaky_relu_sigmoid_scaled.1} parent=1 // pred_region
      %s265 = ssub.s32 128, 128
      %266 = vsyncadd [#allocation3], %s265
      %s268 = sshll.u32 [#allocation2], 4
      %s269 = int_to_ptr.vmem [resolvable:$true] %s268
      %271 = dma.vmem_to_hbm [thread:$0]  %s269, 128, %s7, [#allocation3]
    $region33: #{deep_leaky_relu_sigmoid_scaled.1} parent=1 // pred_fallthru
      _
    // Predicated region
    $region34: #{deep_leaky_relu_sigmoid_scaled.1} parent=1 // pred_check
      _
    $region35: #{deep_leaky_relu_sigmoid_scaled.1} parent=1 // pred_check_branch
      %273 = sbr.rel (0) target = $region37
    $region36: #{deep_leaky_relu_sigmoid_scaled.1} parent=1 // pred_region
      %274 = dma.done [#allocation3], 128
    $region37: #{deep_leaky_relu_sigmoid_scaled.1} parent=1 // pred_fallthru
      _
    %275 = vsyncpa [#allocation3], 1

</llo_original>
